<compile_context>
chip_gen: v5e
topology: v5e:2x2
jax: 0.10.0
libtpu: 0.0.40
codegen_flags: <defaults>
</compile_context>

<pallas_src>
import functools

import jax
import jax.numpy as jnp
from jax.experimental import pallas as pl
from jax.experimental.pallas import tpu as pltpu

LANE = 128      # lane width
SUB = 16        # row alignment (multiple of 16 works for f32 and bf16 inputs)
TR_MAX = 1024   # max row tile: (1024, 128) f32 = 512 KiB per input block
NCORES = 2      # leading parallel grid axis (v7x megacore; harmless on 1-TC chips)


def _dice_partial_kernel(x_ref, t_ref, inter_ref, total_ref, acc_i, acc_s,
                         *, rows_valid):
    c = pl.program_id(0)            # chunk (parallel axis)
    j = pl.program_id(1)            # step within chunk (reduction axis)
    nsteps = pl.num_programs(1)
    br, lane = x_ref.shape

    @pl.when(j == 0)
    def _():
        acc_i[...] = jnp.zeros_like(acc_i)
        acc_s[...] = jnp.zeros_like(acc_s)

    # sigmoid (clamp to [0,1] afterwards is a no-op); accumulate in f32.
    p = jax.nn.sigmoid(x_ref[...].astype(jnp.float32))
    t = t_ref[...].astype(jnp.float32)

    # Global row index of the first row of this (unclamped) block.
    row0 = (c * nsteps + j) * br

    @pl.when(row0 + br <= rows_valid)
    def _():                        # fully valid block: pure elementwise VPU work
        acc_i[...] += p * t
        acc_s[...] += p + t

    @pl.when(row0 + br > rows_valid)
    def _():                        # ragged tail / duplicated block: mask rows
        row = jax.lax.broadcasted_iota(jnp.int32, (br, lane), 0)
        valid = (row0 + row) < rows_valid
        pm = jnp.where(valid, p, 0.0)
        tm = jnp.where(valid, t, 0.0)
        acc_i[...] += pm * tm
        acc_s[...] += pm + tm

    @pl.when(j == nsteps - 1)
    def _():                        # one cross-lane reduction per chunk
        inter_ref[...] = jnp.sum(acc_i[...], keepdims=True)
        total_ref[...] = jnp.sum(acc_s[...], keepdims=True)


def dice_loss(inputs, targets, smooth=1.0):
    """Pallas implementation of DiceLoss.forward(inputs, targets, smooth)."""
    n = int(inputs.size)
    x = inputs.reshape(-1)
    t = targets.reshape(-1)

    # Align the flat length to SUB*LANE. Sentinel padding contributes exactly
    # zero (sigmoid(-1e4) == 0 in f32, target == 0), so no per-element mask is
    # needed.  Most NCHW shapes hit pad == 0 and this is a pure-metadata path.
    pad = (-n) % (SUB * LANE)
    if pad:
        # TODO(synk): this small pad is an HBM copy; only hit when numel % 2048 != 0.
        x = jnp.concatenate([x, jnp.full((pad,), -1e4, x.dtype)])
        t = jnp.concatenate([t, jnp.zeros((pad,), t.dtype)])

    rows = (n + pad) // LANE
    x2 = x.reshape(rows, LANE)
    t2 = t.reshape(rows, LANE)

    br = min(TR_MAX, rows)                   # block rows (multiple of 16, <= rows)
    row_blocks = -(-rows // br)              # ceil(rows / br)
    nchunks = min(NCORES, row_blocks)
    steps = -(-row_blocks // nchunks)        # ceil(row_blocks / nchunks)

    def in_map(c, j):
        # Clamp so overhang / duplicated grid steps re-read the last valid
        # block; their contribution is masked to zero inside the kernel.
        return (jnp.minimum(c * steps + j, row_blocks - 1), 0)

    kernel = functools.partial(_dice_partial_kernel, rows_valid=rows)

    inter, total = pl.pallas_call(
        kernel,
        out_shape=(jax.ShapeDtypeStruct((nchunks, 1), jnp.float32),
                   jax.ShapeDtypeStruct((nchunks, 1), jnp.float32)),
        grid_spec=pltpu.PrefetchScalarGridSpec(
            num_scalar_prefetch=0,
            grid=(nchunks, steps),
            in_specs=[pl.BlockSpec((br, LANE), in_map),
                      pl.BlockSpec((br, LANE), in_map)],
            out_specs=[pl.BlockSpec((1, 1), lambda c, j: (c, 0)),
                       pl.BlockSpec((1, 1), lambda c, j: (c, 0))],
            scratch_shapes=[pltpu.VMEM((br, LANE), jnp.float32),
                            pltpu.VMEM((br, LANE), jnp.float32)],
        ),
        compiler_params=pltpu.CompilerParams(
            dimension_semantics=("parallel", "arbitrary")),
    )(x2, t2)

    intersection = jnp.sum(inter)
    sums = jnp.sum(total)
    smooth = jnp.float32(smooth)
    dice = (2.0 * intersection + smooth) / (sums + smooth)
    return 1.0 - dice


def _dice_loss_ref(inputs, targets, smooth=1.0):
    p = jnp.clip(jax.nn.sigmoid(inputs.astype(jnp.float32)), 0.0, 1.0).reshape(-1)
    t = targets.astype(jnp.float32).reshape(-1)
    inter = jnp.sum(p * t)
    dice = (2.0 * inter + smooth) / (jnp.sum(p) + jnp.sum(t) + smooth)
    return 1.0 - dice


if __name__ == "__main__":
    key = jax.random.PRNGKey(0)
    k_in, k_tg = jax.random.split(key)

    # NCHW logits and binary targets, as in binary segmentation.
    inputs = jax.random.normal(k_in, (2, 4, 16, 16), dtype=jnp.float32)
    targets = jax.random.bernoulli(k_tg, 0.5, (2, 4, 16, 16)).astype(jnp.float32)

    loss = dice_loss(inputs, targets, smooth=1.0)
    loss = jax.block_until_ready(loss)

    ref = _dice_loss_ref(inputs, targets, smooth=1.0)
    assert jnp.allclose(loss, ref, atol=1e-5, rtol=1e-5), (loss, ref)

    print("KERNEL_OK")
</pallas_src>

<mosaic_0001>
module attributes {stable_mosaic.version = 11 : i64} {
  func.func @_dice_partial_kernel(%arg0: i32, %arg1: i32, %arg2: memref<16x128xf32, #tpu.memory_space<vmem>>, %arg3: memref<16x128xf32, #tpu.memory_space<vmem>>, %arg4: memref<1x1xf32, #tpu.memory_space<vmem>>, %arg5: memref<1x1xf32, #tpu.memory_space<vmem>>, %arg6: memref<16x128xf32, #tpu.memory_space<vmem>>, %arg7: memref<16x128xf32, #tpu.memory_space<vmem>>) attributes {dimension_semantics = [#tpu.dimension_semantics<parallel>, #tpu.dimension_semantics<arbitrary>], iteration_bounds = array<i64: 1, 1>, scalar_prefetch = 0 : i64, scratch_operands = 2 : i64, tpu.core_type = #tpu.core_type<tc>, window_params = [{transform_indices = @transform_0, window_bounds = array<i64: 16, 128>}, {transform_indices = @transform_1, window_bounds = array<i64: 16, 128>}, {transform_indices = @transform_2, window_bounds = array<i64: 1, 1>}, {transform_indices = @transform_3, window_bounds = array<i64: 1, 1>}]} {
    %c0_i32 = arith.constant 0 : i32
    %0 = arith.cmpi eq, %arg1, %c0_i32 : i32
    %1 = arith.extui %0 : i1 to i32
    %c0_i32_0 = arith.constant 0 : i32
    %2 = arith.cmpi ne, %1, %c0_i32_0 : i32
    scf.if %2 {
      %cst_12 = arith.constant 0.000000e+00 : f32
      %24 = vector.broadcast %cst_12 : f32 to vector<16x128xf32>
      %c0_13 = arith.constant 0 : index
      %c0_14 = arith.constant 0 : index
      %25 = vector.load %arg6[%c0_13, %c0_14] : memref<16x128xf32, #tpu.memory_space<vmem>>, vector<16x128xf32>
      tpu.vector_store %arg6[%c0_13, %c0_14], %24 {strides = array<i32>} : memref<16x128xf32, #tpu.memory_space<vmem>>, vector<16x128xf32>,
      %cst_15 = arith.constant 0.000000e+00 : f32
      %26 = vector.broadcast %cst_15 : f32 to vector<16x128xf32>
      %c0_16 = arith.constant 0 : index
      %c0_17 = arith.constant 0 : index
      %27 = vector.load %arg7[%c0_16, %c0_17] : memref<16x128xf32, #tpu.memory_space<vmem>>, vector<16x128xf32>
      tpu.vector_store %arg7[%c0_16, %c0_17], %26 {strides = array<i32>} : memref<16x128xf32, #tpu.memory_space<vmem>>, vector<16x128xf32>,
    } else {
    }
    %c0 = arith.constant 0 : index
    %c0_1 = arith.constant 0 : index
    %3 = vector.load %arg2[%c0, %c0_1] : memref<16x128xf32, #tpu.memory_space<vmem>>, vector<16x128xf32>
    %4 = arith.negf %3 : vector<16x128xf32>
    %5 = math.exp %4 : vector<16x128xf32>
    %cst = arith.constant 1.000000e+00 : f32
    %6 = vector.broadcast %cst : f32 to vector<16x128xf32>
    %7 = arith.addf %6, %5 : vector<16x128xf32>
    %8 = arith.divf %6, %7 : vector<16x128xf32>
    %c0_2 = arith.constant 0 : index
    %c0_3 = arith.constant 0 : index
    %9 = vector.load %arg3[%c0_2, %c0_3] : memref<16x128xf32, #tpu.memory_space<vmem>>, vector<16x128xf32>
    %c1_i32 = arith.constant 1 : i32
    %10 = arith.muli %arg0, %c1_i32 : i32
    %11 = arith.addi %10, %arg1 : i32
    %c16_i32 = arith.constant 16 : i32
    %12 = arith.muli %11, %c16_i32 : i32
    %c16_i32_4 = arith.constant 16 : i32
    %13 = arith.addi %12, %c16_i32_4 : i32
    %c16_i32_5 = arith.constant 16 : i32
    %14 = arith.cmpi sle, %13, %c16_i32_5 : i32
    %15 = arith.extui %14 : i1 to i32
    %c0_i32_6 = arith.constant 0 : i32
    %16 = arith.cmpi ne, %15, %c0_i32_6 : i32
    scf.if %16 {
      %c0_12 = arith.constant 0 : index
      %c0_13 = arith.constant 0 : index
      %24 = vector.load %arg6[%c0_12, %c0_13] : memref<16x128xf32, #tpu.memory_space<vmem>>, vector<16x128xf32>
      %25 = arith.mulf %8, %9 : vector<16x128xf32>
      %26 = arith.addf %24, %25 : vector<16x128xf32>
      %c0_14 = arith.constant 0 : index
      %c0_15 = arith.constant 0 : index
      %27 = vector.load %arg6[%c0_14, %c0_15] : memref<16x128xf32, #tpu.memory_space<vmem>>, vector<16x128xf32>
      tpu.vector_store %arg6[%c0_14, %c0_15], %26 {strides = array<i32>} : memref<16x128xf32, #tpu.memory_space<vmem>>, vector<16x128xf32>,
      %c0_16 = arith.constant 0 : index
      %c0_17 = arith.constant 0 : index
      %28 = vector.load %arg7[%c0_16, %c0_17] : memref<16x128xf32, #tpu.memory_space<vmem>>, vector<16x128xf32>
      %29 = arith.addf %8, %9 : vector<16x128xf32>
      %30 = arith.addf %28, %29 : vector<16x128xf32>
      %c0_18 = arith.constant 0 : index
      %c0_19 = arith.constant 0 : index
      %31 = vector.load %arg7[%c0_18, %c0_19] : memref<16x128xf32, #tpu.memory_space<vmem>>, vector<16x128xf32>
      tpu.vector_store %arg7[%c0_18, %c0_19], %30 {strides = array<i32>} : memref<16x128xf32, #tpu.memory_space<vmem>>, vector<16x128xf32>,
    } else {
    }
    %c16_i32_7 = arith.constant 16 : i32
    %17 = arith.addi %12, %c16_i32_7 : i32
    %c16_i32_8 = arith.constant 16 : i32
    %18 = arith.cmpi sgt, %17, %c16_i32_8 : i32
    %19 = arith.extui %18 : i1 to i32
    %c0_i32_9 = arith.constant 0 : i32
    %20 = arith.cmpi ne, %19, %c0_i32_9 : i32
    scf.if %20 {
      %24 = tpu.iota {dimensions = array<i32: 0>} : vector<16x128xi32>
      %25 = vector.broadcast %12 : i32 to vector<16x128xi32>
      %26 = arith.addi %25, %24 : vector<16x128xi32>
      %c16_i32_12 = arith.constant 16 : i32
      %27 = vector.broadcast %c16_i32_12 : i32 to vector<16x128xi32>
      %28 = arith.cmpi slt, %26, %27 : vector<16x128xi32>
      %cst_13 = arith.constant 0.000000e+00 : f32
      %29 = vector.broadcast %cst_13 : f32 to vector<16x128xf32>
      %30 = arith.select %28, %8, %29 : vector<16x128xi1>, vector<16x128xf32>
      %cst_14 = arith.constant 0.000000e+00 : f32
      %31 = vector.broadcast %cst_14 : f32 to vector<16x128xf32>
      %32 = arith.select %28, %9, %31 : vector<16x128xi1>, vector<16x128xf32>
      %c0_15 = arith.constant 0 : index
      %c0_16 = arith.constant 0 : index
      %33 = vector.load %arg6[%c0_15, %c0_16] : memref<16x128xf32, #tpu.memory_space<vmem>>, vector<16x128xf32>
      %34 = arith.mulf %30, %32 : vector<16x128xf32>
      %35 = arith.addf %33, %34 : vector<16x128xf32>
      %c0_17 = arith.constant 0 : index
      %c0_18 = arith.constant 0 : index
      %36 = vector.load %arg6[%c0_17, %c0_18] : memref<16x128xf32, #tpu.memory_space<vmem>>, vector<16x128xf32>
      tpu.vector_store %arg6[%c0_17, %c0_18], %35 {strides = array<i32>} : memref<16x128xf32, #tpu.memory_space<vmem>>, vector<16x128xf32>,
      %c0_19 = arith.constant 0 : index
      %c0_20 = arith.constant 0 : index
      %37 = vector.load %arg7[%c0_19, %c0_20] : memref<16x128xf32, #tpu.memory_space<vmem>>, vector<16x128xf32>
      %38 = arith.addf %30, %32 : vector<16x128xf32>
      %39 = arith.addf %37, %38 : vector<16x128xf32>
      %c0_21 = arith.constant 0 : index
      %c0_22 = arith.constant 0 : index
      %40 = vector.load %arg7[%c0_21, %c0_22] : memref<16x128xf32, #tpu.memory_space<vmem>>, vector<16x128xf32>
      tpu.vector_store %arg7[%c0_21, %c0_22], %39 {strides = array<i32>} : memref<16x128xf32, #tpu.memory_space<vmem>>, vector<16x128xf32>,
    } else {
    }
    %c0_i32_10 = arith.constant 0 : i32
    %21 = arith.cmpi eq, %arg1, %c0_i32_10 : i32
    %22 = arith.extui %21 : i1 to i32
    %c0_i32_11 = arith.constant 0 : i32
    %23 = arith.cmpi ne, %22, %c0_i32_11 : i32
    scf.if %23 {
      %c0_12 = arith.constant 0 : index
      %c0_13 = arith.constant 0 : index
      %24 = vector.load %arg6[%c0_12, %c0_13] : memref<16x128xf32, #tpu.memory_space<vmem>>, vector<16x128xf32>
      %25 = vector.shape_cast %24 : vector<16x128xf32> to vector<1x16x128xf32>
      %cst_14 = arith.constant dense<0.000000e+00> : vector<1xf32>
      %26 = vector.multi_reduction <add>, %25, %cst_14 [1, 2] : vector<1x16x128xf32> to vector<1xf32>
      %27 = vector.shape_cast %26 : vector<1xf32> to vector<1x1x1xf32>
      %28 = vector.extract %27[0, 0, 0] : f32 from vector<1x1x1xf32>
      %29 = vector.broadcast %28 : f32 to vector<1x1xf32>
      %c0_15 = arith.constant 0 : index
      %c0_16 = arith.constant 0 : index
      %30 = vector.load %arg4[%c0_15, %c0_16] : memref<1x1xf32, #tpu.memory_space<vmem>>, vector<1x1xf32>
      tpu.vector_store %arg4[%c0_15, %c0_16], %29 {strides = array<i32>} : memref<1x1xf32, #tpu.memory_space<vmem>>, vector<1x1xf32>,
      %c0_17 = arith.constant 0 : index
      %c0_18 = arith.constant 0 : index
      %31 = vector.load %arg7[%c0_17, %c0_18] : memref<16x128xf32, #tpu.memory_space<vmem>>, vector<16x128xf32>
      %32 = vector.shape_cast %31 : vector<16x128xf32> to vector<1x16x128xf32>
      %cst_19 = arith.constant dense<0.000000e+00> : vector<1xf32>
      %33 = vector.multi_reduction <add>, %32, %cst_19 [1, 2] : vector<1x16x128xf32> to vector<1xf32>
      %34 = vector.shape_cast %33 : vector<1xf32> to vector<1x1x1xf32>
      %35 = vector.extract %34[0, 0, 0] : f32 from vector<1x1x1xf32>
      %36 = vector.broadcast %35 : f32 to vector<1x1xf32>
      %c0_20 = arith.constant 0 : index
      %c0_21 = arith.constant 0 : index
      %37 = vector.load %arg5[%c0_20, %c0_21] : memref<1x1xf32, #tpu.memory_space<vmem>>, vector<1x1xf32>
      tpu.vector_store %arg5[%c0_20, %c0_21], %36 {strides = array<i32>} : memref<1x1xf32, #tpu.memory_space<vmem>>, vector<1x1xf32>,
    } else {
    }
    return
  }
  func.func @transform_0(%arg0: i32, %arg1: i32) -> (i32, i32) {
    %c1_i32 = arith.constant 1 : i32
    %0 = arith.muli %arg0, %c1_i32 : i32
    %1 = arith.addi %0, %arg1 : i32
    %c0_i32 = arith.constant 0 : i32
    %2 = arith.minsi %1, %c0_i32 : i32
    %c0_i32_0 = arith.constant 0 : i32
    %c0_i32_1 = arith.constant 0 : i32
    return %2, %c0_i32_0 : i32, i32
  }
  func.func @transform_1(%arg0: i32, %arg1: i32) -> (i32, i32) {
    %c1_i32 = arith.constant 1 : i32
    %0 = arith.muli %arg0, %c1_i32 : i32
    %1 = arith.addi %0, %arg1 : i32
    %c0_i32 = arith.constant 0 : i32
    %2 = arith.minsi %1, %c0_i32 : i32
    %c0_i32_0 = arith.constant 0 : i32
    %c0_i32_1 = arith.constant 0 : i32
    return %2, %c0_i32_0 : i32, i32
  }
  func.func @transform_2(%arg0: i32, %arg1: i32) -> (i32, i32) {
    %c0_i32 = arith.constant 0 : i32
    %c0_i32_0 = arith.constant 0 : i32
    return %arg0, %c0_i32 : i32, i32
  }
  func.func @transform_3(%arg0: i32, %arg1: i32) -> (i32, i32) {
    %c0_i32 = arith.constant 0 : i32
    %c0_i32_0 = arith.constant 0 : i32
    return %arg0, %c0_i32 : i32, i32
  }
}

</mosaic_0001>

<llo_original>
// kernel: tpu_custom_call.1
$region0: #{tpu_custom_call.1}
  #allocation0 [shape = 'u32[]', space=smem, size = 0x4, offset = 0x4, fixed_abs, tag = 'smem constant byte address 0x4 - core index']
  #allocation1 [shape = 'u32[72,128]{1,0:T(1,128)}', space=vmem, size = 0x9000, scoped, tag = 'internal scratch']
  #allocation2 [shape = 'f32[16,128]{1,0:T(8,128)}', space=vmem, size = 0x2000, scoped, tag = 'scratch operand']
  #allocation3 [shape = 'f32[16,128]{1,0:T(8,128)}', space=vmem, size = 0x2000, scoped, tag = 'scratch operand']
  %s0 = inlined_call_operand.hbm [shape: f32[16,128], index: 0, kind: input, shape index: {}]
  %s1 = inlined_call_operand.hbm [shape: f32[16,128], index: 1, kind: input, shape index: {}]
  %s2 = inlined_call_operand.hbm [shape: f32[1,1], index: 2, kind: output, shape index: {0}]
  %s3 = inlined_call_operand.hbm [shape: f32[1,1], index: 3, kind: output, shape index: {1}]
  %4 = xla_tuple %s2, %s3
  %s5 = sld [smem:[#allocation0]]
  $region50: #{tpu_custom_call.1} parent=0
    _
  %s7 = ssub.s32 1, %s5
  %s8 = scalar_select 0, %s7, %s5
  $region1: #{tpu_custom_call.1} parent=0
    #allocation4 [shape = 'u8[8192]{0}', space=vmem, size = 0x2000, scoped, tag = 'input window, operand 0, single buffered']
    #allocation5 [shape = 's32[1]{0}', space=sflag, size = 0x4, scoped, tag = 'scoped memory for tpu_custom_call.1']
    #allocation6 [shape = 's32[1]{0}', space=sflag, size = 0x4, scoped, tag = 'scoped memory for tpu_custom_call.1']
    #allocation7 [shape = 'u8[8192]{0}', space=vmem, size = 0x2000, scoped, tag = 'input window, operand 1, single buffered']
    #allocation8 [shape = 's32[1]{0}', space=sflag, size = 0x4, scoped, tag = 'scoped memory for tpu_custom_call.1']
    #allocation9 [shape = 'u8[512]{0}', space=vmem, size = 0x400, scoped, tag = 'output window, operand 0, single buffered']
    #allocation10 [shape = 'u8[512]{0}', space=vmem, size = 0x400, scoped, tag = 'output window, operand 1, single buffered']
    #allocation11 [shape = 's32[1]{0}', space=sflag, size = 0x4, scoped, tag = 'scoped memory for tpu_custom_call.1']
    %9 = vsyncpa [#allocation5], 0
    %10 = vsyncpa [#allocation8], 0
    %11 = vsyncpa [#allocation6], 0
    %12 = vsyncpa [#allocation11], 0
    // Predicated region
    $region2: #{tpu_custom_call.1} parent=1 // pred_check
      _
    $region3: #{tpu_custom_call.1} parent=1 // pred_check_branch
      %14 = sbr.rel (0) target = $region5
    $region4: #{tpu_custom_call.1} parent=1 // pred_region
      %s15 = sadd.s32 0, 0
      %p16 = scmp.lt.s32.totalorder %s15, 0
      %s17 = scalar_select %p16, %s15, 0
      %s18 = smul.u32 2, %s17
      %20 = vsyncadd [#allocation5], 0
      %s21 = smul.addr %s18, 8
      %s22 = scalar_lea.hbm %s0, %s21
      %s23 = sshll.u32 %s22, 4
      %s24 = int_to_ptr.hbm [resolvable:$true] %s23
      %s25 = sshll.u32 [#allocation4], 4
      %s26 = int_to_ptr.vmem [resolvable:$true] %s25
      %31 = dma.hbm_to_vmem [thread:$0]  %s24, 256, %s26, [#allocation5], 128, 128, 8
    $region5: #{tpu_custom_call.1} parent=1 // pred_fallthru
      _
    // Predicated region
    $region6: #{tpu_custom_call.1} parent=1 // pred_check
      _
    $region7: #{tpu_custom_call.1} parent=1 // pred_check_branch
      %33 = sbr.rel (0) target = $region9
    $region8: #{tpu_custom_call.1} parent=1 // pred_region
      %s34 = sadd.s32 0, 0
      %p35 = scmp.lt.s32.totalorder %s34, 0
      %s36 = scalar_select %p35, %s34, 0
      %s37 = smul.u32 2, %s36
      %39 = vsyncadd [#allocation8], 0
      %s40 = smul.addr %s37, 8
      %s41 = scalar_lea.hbm %s1, %s40
      %s42 = sshll.u32 %s41, 4
      %s43 = int_to_ptr.hbm [resolvable:$true] %s42
      %s44 = sshll.u32 [#allocation7], 4
      %s45 = int_to_ptr.vmem [resolvable:$true] %s44
      %50 = dma.hbm_to_vmem [thread:$0]  %s43, 256, %s45, [#allocation8], 128, 128, 8
    $region9: #{tpu_custom_call.1} parent=1 // pred_fallthru
      _
    // Predicated region
    $region10: #{tpu_custom_call.1} parent=1 // pred_check
      _
    $region11: #{tpu_custom_call.1} parent=1 // pred_check_branch
      %52 = sbr.rel (0) target = $region13
    $region12: #{tpu_custom_call.1} parent=1 // pred_region
      %54 = dma.done [#allocation5], 256
    $region13: #{tpu_custom_call.1} parent=1 // pred_fallthru
      _
    // Predicated region
    $region14: #{tpu_custom_call.1} parent=1 // pred_check
      _
    $region15: #{tpu_custom_call.1} parent=1 // pred_check_branch
      %56 = sbr.rel (0) target = $region17
    $region16: #{tpu_custom_call.1} parent=1 // pred_region
      %58 = dma.done [#allocation8], 256
    $region17: #{tpu_custom_call.1} parent=1 // pred_fallthru
      _
    %s59 = sadd.s32 0, 0
    %p60 = scmp.lt.s32.totalorder %s59, 0
    %s61 = scalar_select %p60, %s59, 0
    %s62 = smul.u32 2, %s61
    %s63 = sadd.s32 0, 0
    %p64 = scmp.lt.s32.totalorder %s63, 0
    %s65 = scalar_select %p64, %s63, 0
    %s66 = smul.u32 2, %s65
    %p67 = scmp.eq.s32.totalorder 0, 0
    // Predicated region
    $region18: #{tpu_custom_call.1} parent=1 // pred_check
      %p68 = pneg %p67
    $region19: #{tpu_custom_call.1} parent=1 // pred_check_branch
      %70 = sbr.rel (%p68) target = $region21
    $region20: #{tpu_custom_call.1} parent=1 // pred_region
      %71 = vst [vmem:[#allocation2] sm:$0xff] 0.0
      %72 = vst [vmem:[#allocation2 + $0x8] sm:$0xff] 0.0
      %73 = vst [vmem:[#allocation3] sm:$0xff] 0.0
      %74 = vst [vmem:[#allocation3 + $0x8] sm:$0xff] 0.0
    $region21: #{tpu_custom_call.1} parent=1 // pred_fallthru
      _
    %v75 = vld [vmem:[#allocation4] sm:$0xff]
    %v76 = vld [vmem:[#allocation4 + $0x8] sm:$0xff]
    %v77 = vxor.u32 %v75, 2147483648
    %v78 = vxor.u32 %v76, 2147483648
    %v79 = vmul.f32 %v77, 1.442695
    %v80 = vpow.pop %v79
    %v81 = vmul.f32 %v78, 1.442695
    %v82 = vpow.pop %v81
    %v83 = vadd.f32 %v80, 1.0
    %v84 = vadd.f32 %v82, 1.0
    %v85 = vrcp.pop %v83
    %v86 = vmul.f32 %v83, %v85
    %v87 = vsub.f32 1.0, %v86
    %v88 = vmul.f32 %v85, %v87
    %v89 = vadd.f32 %v85, %v88
    %vm90 = vweird.f32 %v83
    %vm91 = vweird.f32 %v85
    %vm92 = vmor %vm90, %vm91
    %v93 = vsel %vm92, %v85, %v89
    %v94 = vand.u32 2147483647, %v83
    %vm95 = vcmp.eq.f32.partialorder %v94, 8.507059e+37
    %v96 = vand.u32 %v83, 2147483648
    %v97 = vor.u32 1.1754944e-38, %v96
    %v98 = vsel %vm95, %v97, %v93
    %v99 = vmul.f32 1.0, %v98
    %v100 = vrcp.pop %v84
    %v101 = vmul.f32 %v84, %v100
    %v102 = vsub.f32 1.0, %v101
    %v103 = vmul.f32 %v100, %v102
    %v104 = vadd.f32 %v100, %v103
    %vm105 = vweird.f32 %v84
    %vm106 = vweird.f32 %v100
    %vm107 = vmor %vm105, %vm106
    %v108 = vsel %vm107, %v100, %v104
    %v109 = vand.u32 2147483647, %v84
    %vm110 = vcmp.eq.f32.partialorder %v109, 8.507059e+37
    %v111 = vand.u32 %v84, 2147483648
    %v112 = vor.u32 1.1754944e-38, %v111
    %v113 = vsel %vm110, %v112, %v108
    %v114 = vmul.f32 1.0, %v113
    %v115 = vld [vmem:[#allocation7] sm:$0xff]
    %v116 = vld [vmem:[#allocation7 + $0x8] sm:$0xff]
    %s117 = sadd.s32 0, 0
    %s118 = smul.u32 %s117, 16
    %s119 = sadd.s32 %s118, 16
    %p120 = scmp.le.s32.totalorder %s119, 16
    // Predicated region
    $region22: #{tpu_custom_call.1} parent=1 // pred_check
      %p121 = pneg %p120
    $region23: #{tpu_custom_call.1} parent=1 // pred_check_branch
      %123 = sbr.rel (%p121) target = $region25
    $region24: #{tpu_custom_call.1} parent=1 // pred_region
      %v124 = vld [vmem:[#allocation2] sm:$0xff]
      %v125 = vld [vmem:[#allocation2 + $0x8] sm:$0xff]
      %v126 = vmul.f32 %v99, %v115
      %v127 = vmul.f32 %v114, %v116
      %v128 = vadd.f32 %v124, %v126
      %v129 = vadd.f32 %v125, %v127
      %130 = vst [vmem:[#allocation2] sm:$0xff] %v128
      %131 = vst [vmem:[#allocation2 + $0x8] sm:$0xff] %v129
      %v132 = vld [vmem:[#allocation3] sm:$0xff]
      %v133 = vld [vmem:[#allocation3 + $0x8] sm:$0xff]
      %v134 = vadd.f32 %v99, %v115
      %v135 = vadd.f32 %v114, %v116
      %v136 = vadd.f32 %v132, %v134
      %v137 = vadd.f32 %v133, %v135
      %138 = vst [vmem:[#allocation3] sm:$0xff] %v136
      %139 = vst [vmem:[#allocation3 + $0x8] sm:$0xff] %v137
    $region25: #{tpu_custom_call.1} parent=1 // pred_fallthru
      _
    %p140 = scmp.gt.s32.totalorder %s119, 16
    // Predicated region
    $region26: #{tpu_custom_call.1} parent=1 // pred_check
      %p141 = pneg %p140
    $region27: #{tpu_custom_call.1} parent=1 // pred_check_branch
      %143 = sbr.rel (%p141) target = $region29
    $region28: #{tpu_custom_call.1} parent=1 // pred_region
      %v144 = vlaneseq
      %v145 = vshrl.u32 %v144, 7
      %v146 = vadd.s32 %v145, 8
      %v147 = vstv %s118
      %v148 = vadd.s32 %v147, %v145
      %v149 = vadd.s32 %v147, %v146
      %vm150 = vcmp.lt.s32.totalorder %v148, 16
      %vm151 = vcmp.lt.s32.totalorder %v149, 16
      %v152 = vsel %vm150, %v99, 0.0
      %v153 = vsel %vm151, %v114, 0.0
      %v154 = vsel %vm150, %v115, 0.0
      %v155 = vsel %vm151, %v116, 0.0
      %v156 = vld [vmem:[#allocation2] sm:$0xff]
      %v157 = vld [vmem:[#allocation2 + $0x8] sm:$0xff]
      %v158 = vmul.f32 %v152, %v154
      %v159 = vmul.f32 %v153, %v155
      %v160 = vadd.f32 %v156, %v158
      %v161 = vadd.f32 %v157, %v159
      %162 = vst [vmem:[#allocation2] sm:$0xff] %v160
      %163 = vst [vmem:[#allocation2 + $0x8] sm:$0xff] %v161
      %v164 = vld [vmem:[#allocation3] sm:$0xff]
      %v165 = vld [vmem:[#allocation3 + $0x8] sm:$0xff]
      %v166 = vadd.f32 %v152, %v154
      %v167 = vadd.f32 %v153, %v155
      %v168 = vadd.f32 %v164, %v166
      %v169 = vadd.f32 %v165, %v167
      %170 = vst [vmem:[#allocation3] sm:$0xff] %v168
      %171 = vst [vmem:[#allocation3 + $0x8] sm:$0xff] %v169
    $region29: #{tpu_custom_call.1} parent=1 // pred_fallthru
      _
    // Predicated region
    $region30: #{tpu_custom_call.1} parent=1 // pred_check
      %p172 = pneg %p67
    $region31: #{tpu_custom_call.1} parent=1 // pred_check_branch
      %174 = sbr.rel (%p172) target = $region33
    $region32: #{tpu_custom_call.1} parent=1 // pred_region
      %v175 = vld [vmem:[#allocation2] sm:$0xff]
      %v176 = vld [vmem:[#allocation2 + $0x8] sm:$0xff]
      %v177 = vadd.f32 %v175, %v176
      %178 = vadd.xlane.f32.xlu0 %v177
      %v179 = vpop.xlane.xlu0 %178
      %v180 = vrot.slane %v179, 4
      %v181 = vadd.f32 %v179, %v180
      %v182 = vrot.slane %v181, 2
      %v183 = vadd.f32 %v181, %v182
      %v184 = vrot.slane %v183, 1
      %v185 = vadd.f32 %v183, %v184
      %s186 = vtos %v185
      %v187 = vstv %s186
      %vm188 = vcmask 0
      %189 = vst.msk [vmem:[#allocation9] sm:$0x1] %vm188, %v187
      %v190 = vld [vmem:[#allocation3] sm:$0xff]
      %v191 = vld [vmem:[#allocation3 + $0x8] sm:$0xff]
      %v192 = vadd.f32 %v190, %v191
      %193 = vadd.xlane.f32.xlu0 %v192
      %v194 = vpop.xlane.xlu0 %193
      %v195 = vrot.slane %v194, 4
      %v196 = vadd.f32 %v194, %v195
      %v197 = vrot.slane %v196, 2
      %v198 = vadd.f32 %v196, %v197
      %v199 = vrot.slane %v198, 1
      %v200 = vadd.f32 %v198, %v199
      %s201 = vtos %v200
      %v202 = vstv %s201
      %203 = vst.msk [vmem:[#allocation10] sm:$0x1] %vm188, %v202
    $region33: #{tpu_custom_call.1} parent=1 // pred_fallthru
      _
    // Predicated region
    $region34: #{tpu_custom_call.1} parent=1 // pred_check
      _
    $region35: #{tpu_custom_call.1} parent=1 // pred_check_branch
      %205 = sbr.rel (0) target = $region37
    $region36: #{tpu_custom_call.1} parent=1 // pred_region
      %207 = vsyncadd [#allocation6], 0
      %s209 = sshll.u32 [#allocation9], 4
      %s210 = int_to_ptr.vmem [resolvable:$true] %s209
      %s211 = sshll.u32 %s2, 4
      %s212 = int_to_ptr.hbm [resolvable:$true] %s211
      %214 = dma.vmem_to_hbm [thread:$0]  %s210, 16, %s212, [#allocation6]
    $region37: #{tpu_custom_call.1} parent=1 // pred_fallthru
      _
    // Predicated region
    $region38: #{tpu_custom_call.1} parent=1 // pred_check
      _
    $region39: #{tpu_custom_call.1} parent=1 // pred_check_branch
      %216 = sbr.rel (0) target = $region41
    $region40: #{tpu_custom_call.1} parent=1 // pred_region
      %218 = vsyncadd [#allocation11], 0
      %s220 = sshll.u32 [#allocation10], 4
      %s221 = int_to_ptr.vmem [resolvable:$true] %s220
      %s222 = sshll.u32 %s3, 4
      %s223 = int_to_ptr.hbm [resolvable:$true] %s222
      %225 = dma.vmem_to_hbm [thread:$0]  %s221, 16, %s223, [#allocation11]
    $region41: #{tpu_custom_call.1} parent=1 // pred_fallthru
      _
    // Predicated region
    $region42: #{tpu_custom_call.1} parent=1 // pred_check
      _
    $region43: #{tpu_custom_call.1} parent=1 // pred_check_branch
      %227 = sbr.rel (0) target = $region45
    $region44: #{tpu_custom_call.1} parent=1 // pred_region
      %229 = dma.done [#allocation6], 16
    $region45: #{tpu_custom_call.1} parent=1 // pred_fallthru
      _
    // Predicated region
    $region46: #{tpu_custom_call.1} parent=1 // pred_check
      _
    $region47: #{tpu_custom_call.1} parent=1 // pred_check_branch
      %231 = sbr.rel (0) target = $region49
    $region48: #{tpu_custom_call.1} parent=1 // pred_region
      %233 = dma.done [#allocation11], 16
    $region49: #{tpu_custom_call.1} parent=1 // pred_fallthru
      _
    %234 = vsyncpa [#allocation5], 1
    %235 = vsyncpa [#allocation8], 1
    %236 = vsyncpa [#allocation6], 1
    %237 = vsyncpa [#allocation11], 1

</llo_original>
